<compile_context>
chip_gen: v7x
topology: tpu7x:2x2x1
jax: 0.10.0
libtpu: 0.0.40
codegen_flags: <defaults>
</compile_context>

<pallas_src>
import jax
import jax.numpy as jnp
from jax.experimental import pallas as pl
from jax.experimental.pallas import tpu as pltpu

LANES = 128
SUBLANES = 8
ALIGN = LANES * SUBLANES          # 1024 elements = one (8,128) f32 vreg tile
MAX_TILE_ROWS = 4096              # 4096x128 f32 = 2 MiB per stream per buffer


def _bce_terms(x, t):
    """Elementwise binary cross entropy on logits, matching PyTorch's -100 log clamp."""
    x = x.astype(jnp.float32)
    t = t.astype(jnp.float32)
    sp = jnp.log1p(jnp.exp(-jnp.abs(x)))                        # shared softplus(-|x|)
    log_p = jnp.maximum(jnp.minimum(x, 0.0) - sp, -100.0)       # log(sigmoid(x))
    log_1mp = jnp.maximum(jnp.minimum(-x, 0.0) - sp, -100.0)    # log(1 - sigmoid(x))
    return -(t * log_p + (1.0 - t) * log_1mp)


def _make_kernel(tile_rows, num_tiles, rows_in_last):
    def kernel(x_ref, t_ref, out_ref, acc_ref):
        i = pl.program_id(0)

        @pl.when(i == 0)
        def _():
            acc_ref[...] = jnp.zeros_like(acc_ref)

        bce = _bce_terms(x_ref[...], t_ref[...])

        def reduce_add(vals, nrows):
            # (nrows, 128) -> (8, 128): tree-ish partial sum, pure VPU adds.
            acc_ref[...] += vals.reshape(nrows // SUBLANES, SUBLANES, LANES).sum(axis=0)

        if rows_in_last == tile_rows:
            # Every tile is full: unmasked accumulate each step.
            reduce_add(bce, tile_rows)
        else:
            @pl.when(i < num_tiles - 1)
            def _():
                reduce_add(bce, tile_rows)

            @pl.when(i == num_tiles - 1)
            def _():
                # Static (8-aligned) row slice keeps the overhang's stale-VMEM garbage
                # (possibly NaN/Inf) out of the accumulator; no iotas, no select.
                reduce_add(bce[:rows_in_last], rows_in_last)

        @pl.when(i == num_tiles - 1)
        def _():
            # Single small sublane reduce; lane reduce finishes in the wrapper.
            out_ref[...] = jnp.sum(acc_ref[...], axis=0, keepdims=True)

    return kernel


def focal_loss(inputs, targets, alpha, gamma):
    n = inputs.size
    x = inputs.reshape(-1)
    t = targets.reshape(-1)

    n_main = (n // ALIGN) * ALIGN        # (8,128)-aligned prefix streamed through the kernel
    rows = n_main // LANES               # multiple of 8 by construction
    bce_sum = jnp.zeros((), jnp.float32)

    if rows > 0:
        if n_main == n:
            xm = x.reshape(rows, LANES)
            tm = t.reshape(rows, LANES)
        else:
            xm = x[:n_main].reshape(rows, LANES)
            tm = t[:n_main].reshape(rows, LANES)

        tile_rows = min(rows, MAX_TILE_ROWS)
        num_tiles = pl.cdiv(rows, tile_rows)
        rows_in_last = rows - (num_tiles - 1) * tile_rows

        bytes_in = n_main * (xm.dtype.itemsize + tm.dtype.itemsize)
        partials = pl.pallas_call(
            _make_kernel(tile_rows, num_tiles, rows_in_last),
            out_shape=jax.ShapeDtypeStruct((1, LANES), jnp.float32),
            grid=(num_tiles,),
            in_specs=[
                pl.BlockSpec((tile_rows, LANES), lambda i: (i, 0)),   # logits (native dtype)
                pl.BlockSpec((tile_rows, LANES), lambda i: (i, 0)),   # targets (native dtype)
            ],
            out_specs=pl.BlockSpec((1, LANES), lambda i: (0, 0)),
            scratch_shapes=[pltpu.VMEM((SUBLANES, LANES), jnp.float32)],
            compiler_params=pltpu.CompilerParams(
                dimension_semantics=("arbitrary",)),
            cost_estimate=pl.CostEstimate(
                flops=12 * n_main,
                transcendentals=2 * n_main,
                bytes_accessed=bytes_in + 4 * LANES),
        )(xm, tm)
        bce_sum = jnp.sum(partials)

    if n_main != n:
        # Ragged (<1024 element) tail: negligible work, fold into scalar math in pure JAX.
        bce_sum = bce_sum + jnp.sum(_bce_terms(x[n_main:], t[n_main:]))

    bce_mean = bce_sum / float(n)
    return alpha * (1.0 - jnp.exp(-bce_mean)) ** gamma * bce_mean


def focal_loss_ref(inputs, targets, alpha, gamma):
    # Pure-JAX reference mirroring PyTorch: sigmoid -> binary_cross_entropy(mean) -> focal.
    p = jax.nn.sigmoid(inputs.astype(jnp.float32)).reshape(-1)
    t = targets.astype(jnp.float32).reshape(-1)
    bce = jnp.mean(
        -(t * jnp.maximum(jnp.log(p), -100.0)
          + (1.0 - t) * jnp.maximum(jnp.log1p(-p), -100.0)))
    return alpha * (1.0 - jnp.exp(-bce)) ** gamma * bce


if __name__ == "__main__":
    key = jax.random.PRNGKey(0)
    k1, k2 = jax.random.split(key)
    # NCHW-style input, small shapes: batch=2, channels=4, spatial=16x16
    x = jax.random.normal(k1, (2, 4, 16, 16), dtype=jnp.float32)
    targets = jax.random.bernoulli(k2, 0.5, (2, 4, 16, 16)).astype(jnp.float32)
    alpha, gamma = 0.8, 2.0

    loss = focal_loss(x, targets, alpha, gamma)
    jax.block_until_ready(loss)

    ref = focal_loss_ref(x, targets, alpha, gamma)
    assert jnp.allclose(loss, ref, atol=1e-5, rtol=1e-5), (loss, ref)
    print("KERNEL_OK")
</pallas_src>

<mosaic_0001>
module attributes {stable_mosaic.version = 11 : i64} {
  func.func @kernel(%arg0: i32, %arg1: memref<16x128xf32, #tpu.memory_space<vmem>>, %arg2: memref<16x128xf32, #tpu.memory_space<vmem>>, %arg3: memref<1x128xf32, #tpu.memory_space<vmem>>, %arg4: memref<8x128xf32, #tpu.memory_space<vmem>>) attributes {dimension_semantics = [#tpu.dimension_semantics<arbitrary>], iteration_bounds = array<i64: 1>, scalar_prefetch = 0 : i64, scratch_operands = 1 : i64, tpu.core_type = #tpu.core_type<tc>, window_params = [{transform_indices = @transform_0, window_bounds = array<i64: 16, 128>}, {transform_indices = @transform_1, window_bounds = array<i64: 16, 128>}, {pipeline_mode = #tpu.pipeline_mode<synchronous>, transform_indices = @transform_2, window_bounds = array<i64: 1, 128>}]} {
    %c0_i32 = arith.constant 0 : i32
    %0 = arith.cmpi eq, %arg0, %c0_i32 : i32
    %1 = arith.extui %0 : i1 to i32
    %c0_i32_0 = arith.constant 0 : i32
    %2 = arith.cmpi ne, %1, %c0_i32_0 : i32
    scf.if %2 {
      %cst_18 = arith.constant 0.000000e+00 : f32
      %37 = vector.broadcast %cst_18 : f32 to vector<8x128xf32>
      %c0_19 = arith.constant 0 : index
      %c0_20 = arith.constant 0 : index
      %38 = vector.load %arg4[%c0_19, %c0_20] : memref<8x128xf32, #tpu.memory_space<vmem>>, vector<8x128xf32>
      tpu.vector_store %arg4[%c0_19, %c0_20], %37 {strides = array<i32>} : memref<8x128xf32, #tpu.memory_space<vmem>>, vector<8x128xf32>,
    } else {
    }
    %c0 = arith.constant 0 : index
    %c0_1 = arith.constant 0 : index
    %3 = vector.load %arg1[%c0, %c0_1] : memref<16x128xf32, #tpu.memory_space<vmem>>, vector<16x128xf32>
    %c0_2 = arith.constant 0 : index
    %c0_3 = arith.constant 0 : index
    %4 = vector.load %arg2[%c0_2, %c0_3] : memref<16x128xf32, #tpu.memory_space<vmem>>, vector<16x128xf32>
    %5 = math.absf %3 : vector<16x128xf32>
    %cst = arith.constant 0.000000e+00 : f32
    %6 = vector.broadcast %cst : f32 to vector<16x128xf32>
    %7 = arith.subf %6, %5 : vector<16x128xf32>
    %8 = math.exp %7 : vector<16x128xf32>
    %9 = math.log1p %8 : vector<16x128xf32>
    %cst_4 = arith.constant 0.000000e+00 : f32
    %10 = vector.broadcast %cst_4 : f32 to vector<16x128xf32>
    %11 = arith.minimumf %3, %10 : vector<16x128xf32>
    %12 = arith.subf %11, %9 : vector<16x128xf32>
    %cst_5 = arith.constant -1.000000e+02 : f32
    %13 = vector.broadcast %cst_5 : f32 to vector<16x128xf32>
    %14 = arith.maximumf %12, %13 : vector<16x128xf32>
    %cst_6 = arith.constant 0.000000e+00 : f32
    %15 = vector.broadcast %cst_6 : f32 to vector<16x128xf32>
    %16 = arith.subf %15, %3 : vector<16x128xf32>
    %cst_7 = arith.constant 0.000000e+00 : f32
    %17 = vector.broadcast %cst_7 : f32 to vector<16x128xf32>
    %18 = arith.minimumf %16, %17 : vector<16x128xf32>
    %19 = arith.subf %18, %9 : vector<16x128xf32>
    %cst_8 = arith.constant -1.000000e+02 : f32
    %20 = vector.broadcast %cst_8 : f32 to vector<16x128xf32>
    %21 = arith.maximumf %19, %20 : vector<16x128xf32>
    %22 = arith.mulf %4, %14 : vector<16x128xf32>
    %cst_9 = arith.constant 1.000000e+00 : f32
    %23 = vector.broadcast %cst_9 : f32 to vector<16x128xf32>
    %24 = arith.subf %23, %4 : vector<16x128xf32>
    %25 = arith.mulf %24, %21 : vector<16x128xf32>
    %26 = arith.addf %22, %25 : vector<16x128xf32>
    %cst_10 = arith.constant 0.000000e+00 : f32
    %27 = vector.broadcast %cst_10 : f32 to vector<16x128xf32>
    %28 = arith.subf %27, %26 : vector<16x128xf32>
    %c0_11 = arith.constant 0 : index
    %c0_12 = arith.constant 0 : index
    %29 = vector.load %arg4[%c0_11, %c0_12] : memref<8x128xf32, #tpu.memory_space<vmem>>, vector<8x128xf32>
    %30 = vector.shape_cast %28 : vector<16x128xf32> to vector<2x8x128xf32>
    %cst_13 = arith.constant dense<0.000000e+00> : vector<8x128xf32>
    %31 = vector.multi_reduction <add>, %30, %cst_13 [0] : vector<2x8x128xf32> to vector<8x128xf32>
    %32 = arith.addf %29, %31 : vector<8x128xf32>
    %c0_14 = arith.constant 0 : index
    %c0_15 = arith.constant 0 : index
    %33 = vector.load %arg4[%c0_14, %c0_15] : memref<8x128xf32, #tpu.memory_space<vmem>>, vector<8x128xf32>
    tpu.vector_store %arg4[%c0_14, %c0_15], %32 {strides = array<i32>} : memref<8x128xf32, #tpu.memory_space<vmem>>, vector<8x128xf32>,
    %c0_i32_16 = arith.constant 0 : i32
    %34 = arith.cmpi eq, %arg0, %c0_i32_16 : i32
    %35 = arith.extui %34 : i1 to i32
    %c0_i32_17 = arith.constant 0 : i32
    %36 = arith.cmpi ne, %35, %c0_i32_17 : i32
    scf.if %36 {
      %c0_18 = arith.constant 0 : index
      %c0_19 = arith.constant 0 : index
      %37 = vector.load %arg4[%c0_18, %c0_19] : memref<8x128xf32, #tpu.memory_space<vmem>>, vector<8x128xf32>
      %cst_20 = arith.constant dense<0.000000e+00> : vector<128xf32>
      %38 = vector.multi_reduction <add>, %37, %cst_20 [0] : vector<8x128xf32> to vector<128xf32>
      %39 = vector.shape_cast %38 : vector<128xf32> to vector<1x128xf32>
      %c0_21 = arith.constant 0 : index
      %c0_22 = arith.constant 0 : index
      %40 = vector.load %arg3[%c0_21, %c0_22] : memref<1x128xf32, #tpu.memory_space<vmem>>, vector<1x128xf32>
      tpu.vector_store %arg3[%c0_21, %c0_22], %39 {strides = array<i32>} : memref<1x128xf32, #tpu.memory_space<vmem>>, vector<1x128xf32>,
    } else {
    }
    return
  }
  func.func @transform_0(%arg0: i32) -> (i32, i32) {
    %c0_i32 = arith.constant 0 : i32
    %c0_i32_0 = arith.constant 0 : i32
    return %arg0, %c0_i32 : i32, i32
  }
  func.func @transform_1(%arg0: i32) -> (i32, i32) {
    %c0_i32 = arith.constant 0 : i32
    %c0_i32_0 = arith.constant 0 : i32
    return %arg0, %c0_i32 : i32, i32
  }
  func.func @transform_2(%arg0: i32) -> (i32, i32) {
    %c0_i32 = arith.constant 0 : i32
    %c0_i32_0 = arith.constant 0 : i32
    %c0_i32_1 = arith.constant 0 : i32
    return %c0_i32, %c0_i32_0 : i32, i32
  }
}

</mosaic_0001>

<llo_original>
// kernel: tpu_custom_call.1
$region0: #{tpu_custom_call.1}
  #allocation0 [shape = 'u32[]', space=smem, size = 0x4, offset = 0x4, fixed_abs, tag = 'smem constant byte address 0x4 - core index']
  #allocation1 [shape = 'u32[144,128]{1,0:T(1,128)}', space=vmem, size = 0x12000, scoped, tag = 'internal scratch']
  #allocation2 [shape = 'f32[8,128]{1,0:T(8,128)}', space=vmem, size = 0x1000, scoped, tag = 'scratch operand']
  %s0 = inlined_call_operand.hbm [shape: f32[16,128], index: 0, kind: input, shape index: {}]
  %s1 = inlined_call_operand.hbm [shape: f32[16,128], index: 1, kind: input, shape index: {}]
  %s2 = inlined_call_operand.hbm [shape: f32[1,128], index: 2, kind: output, shape index: {}]
  %s3 = sld [smem:[#allocation0]]
  $region34: #{tpu_custom_call.1} parent=0
    _
  %s5 = ssub.s32 1, %s3
  %s6 = scalar_select 0, %s5, %s3
  $region1: #{tpu_custom_call.1} parent=0
    #allocation3 [shape = 'u8[8192]{0}', space=vmem, size = 0x2000, scoped, tag = 'input window, operand 0, single buffered']
    #allocation4 [shape = 's32[1]{0}', space=sflag, size = 0x4, scoped, tag = 'scoped memory for tpu_custom_call.1']
    #allocation5 [shape = 's32[1]{0}', space=sflag, size = 0x4, scoped, tag = 'scoped memory for tpu_custom_call.1']
    #allocation6 [shape = 'u8[8192]{0}', space=vmem, size = 0x2000, scoped, tag = 'input window, operand 1, single buffered']
    #allocation7 [shape = 's32[1]{0}', space=sflag, size = 0x4, scoped, tag = 'scoped memory for tpu_custom_call.1']
    #allocation8 [shape = 'u8[512]{0}', space=vmem, size = 0x400, scoped, tag = 'output window, operand 0, single buffered']
    %7 = vsyncpa [#allocation4], 0
    %8 = vsyncpa [#allocation7], 0
    %9 = vsyncpa [#allocation5], 0
    // Predicated region
    $region2: #{tpu_custom_call.1} parent=1 // pred_check
      _
    $region3: #{tpu_custom_call.1} parent=1 // pred_check_branch
      %11 = sbr.rel (0) target = $region5
    $region4: #{tpu_custom_call.1} parent=1 // pred_region
      %s13 = ssub.s32 256, 256
      %14 = vsyncadd [#allocation4], %s13
      %s15 = sshll.u32 [#allocation3], 4
      %s16 = int_to_ptr.vmem [resolvable:$true] %s15
      %21 = dma.hbm_to_vmem [thread:$0]  %s0, 256, %s16, [#allocation4], 128, 128, 8
    $region5: #{tpu_custom_call.1} parent=1 // pred_fallthru
      _
    // Predicated region
    $region6: #{tpu_custom_call.1} parent=1 // pred_check
      _
    $region7: #{tpu_custom_call.1} parent=1 // pred_check_branch
      %23 = sbr.rel (0) target = $region9
    $region8: #{tpu_custom_call.1} parent=1 // pred_region
      %s25 = ssub.s32 256, 256
      %26 = vsyncadd [#allocation7], %s25
      %s27 = sshll.u32 [#allocation6], 4
      %s28 = int_to_ptr.vmem [resolvable:$true] %s27
      %33 = dma.hbm_to_vmem [thread:$0]  %s1, 256, %s28, [#allocation7], 128, 128, 8
    $region9: #{tpu_custom_call.1} parent=1 // pred_fallthru
      _
    // Predicated region
    $region10: #{tpu_custom_call.1} parent=1 // pred_check
      _
    $region11: #{tpu_custom_call.1} parent=1 // pred_check_branch
      %35 = sbr.rel (0) target = $region13
    $region12: #{tpu_custom_call.1} parent=1 // pred_region
      %36 = dma.done [#allocation4], 256
    $region13: #{tpu_custom_call.1} parent=1 // pred_fallthru
      _
    // Predicated region
    $region14: #{tpu_custom_call.1} parent=1 // pred_check
      _
    $region15: #{tpu_custom_call.1} parent=1 // pred_check_branch
      %38 = sbr.rel (0) target = $region17
    $region16: #{tpu_custom_call.1} parent=1 // pred_region
      %39 = dma.done [#allocation7], 256
    $region17: #{tpu_custom_call.1} parent=1 // pred_fallthru
      _
    %p40 = scmp.eq.s32.totalorder 0, 0
    // Predicated region
    $region18: #{tpu_custom_call.1} parent=1 // pred_check
      %p41 = pneg %p40
    $region19: #{tpu_custom_call.1} parent=1 // pred_check_branch
      %43 = sbr.rel (%p41) target = $region21
    $region20: #{tpu_custom_call.1} parent=1 // pred_region
      %44 = vst [vmem:[#allocation2] sm:$0xff] 0.0
    $region21: #{tpu_custom_call.1} parent=1 // pred_fallthru
      _
    %v45 = vld [vmem:[#allocation3] sm:$0xff]
    %v46 = vld [vmem:[#allocation3 + $0x8] sm:$0xff]
    %v47 = vld [vmem:[#allocation6] sm:$0xff]
    %v48 = vld [vmem:[#allocation6 + $0x8] sm:$0xff]
    %v49 = vand.u32 2147483647, %v45
    %v50 = vand.u32 2147483647, %v46
    %v51 = vsub.f32 0.0, %v49
    %v52 = vsub.f32 0.0, %v50
    %v53 = vmul.f32 %v51, 1.442695
    %v54 = vpow.pop %v53
    %v55 = vmul.f32 %v52, 1.442695
    %v56 = vpow.pop %v55
    %v57 = vadd.f32 %v54, 1.0
    %v58 = vlog2.pop %v57
    %v59 = vmul.f32 %v58, 0.6931472
    %v60 = vmul.f32 -0.5, %v54
    %v61 = vadd.f32 %v60, 1.0
    %v62 = vmul.f32 %v61, %v54
    %v63 = vand.u32 2147483647, %v54
    %vm64 = vcmp.lt.f32.partialorder %v63, 0.0004427343
    %v65 = vsel %vm64, %v62, %v59
    %v66 = vadd.f32 %v56, 1.0
    %v67 = vlog2.pop %v66
    %v68 = vmul.f32 %v67, 0.6931472
    %v69 = vmul.f32 -0.5, %v56
    %v70 = vadd.f32 %v69, 1.0
    %v71 = vmul.f32 %v70, %v56
    %v72 = vand.u32 2147483647, %v56
    %vm73 = vcmp.lt.f32.partialorder %v72, 0.0004427343
    %v74 = vsel %vm73, %v71, %v68
    %v75 = vmin.f32 %v45, 0.0
    %v76 = vmin.f32 %v46, 0.0
    %v77 = vsub.f32 %v75, %v65
    %v78 = vsub.f32 %v76, %v74
    %v79 = vmax.f32 %v77, -100.0
    %v80 = vmax.f32 %v78, -100.0
    %v81 = vsub.f32 0.0, %v45
    %v82 = vsub.f32 0.0, %v46
    %v83 = vmin.f32 %v81, 0.0
    %v84 = vmin.f32 %v82, 0.0
    %v85 = vsub.f32 %v83, %v65
    %v86 = vsub.f32 %v84, %v74
    %v87 = vmax.f32 %v85, -100.0
    %v88 = vmax.f32 %v86, -100.0
    %v89 = vmul.f32 %v47, %v79
    %v90 = vmul.f32 %v48, %v80
    %v91 = vsub.f32 1.0, %v47
    %v92 = vsub.f32 1.0, %v48
    %v93 = vmul.f32 %v91, %v87
    %v94 = vmul.f32 %v92, %v88
    %v95 = vadd.f32 %v89, %v93
    %v96 = vadd.f32 %v90, %v94
    %v97 = vsub.f32 0.0, %v95
    %v98 = vsub.f32 0.0, %v96
    %v99 = vld [vmem:[#allocation2] sm:$0xff]
    %v100 = vadd.f32 %v97, %v98
    %v101 = vadd.f32 %v99, %v100
    %102 = vst [vmem:[#allocation2] sm:$0xff] %v101
    // Predicated region
    $region22: #{tpu_custom_call.1} parent=1 // pred_check
      %p103 = pneg %p40
    $region23: #{tpu_custom_call.1} parent=1 // pred_check_branch
      %105 = sbr.rel (%p103) target = $region25
    $region24: #{tpu_custom_call.1} parent=1 // pred_region
      %v106 = vld [vmem:[#allocation2] sm:$0xff]
      %v107 = vrot.slane %v106, 4
      %v108 = vadd.f32 %v106, %v107
      %v109 = vrot.slane %v108, 2
      %v110 = vadd.f32 %v108, %v109
      %v111 = vrot.slane %v110, 1
      %v112 = vadd.f32 %v110, %v111
      %113 = vst [vmem:[#allocation8] sm:$0x1] %v112
    $region25: #{tpu_custom_call.1} parent=1 // pred_fallthru
      _
    // Predicated region
    $region26: #{tpu_custom_call.1} parent=1 // pred_check
      _
    $region27: #{tpu_custom_call.1} parent=1 // pred_check_branch
      %115 = sbr.rel (0) target = $region29
    $region28: #{tpu_custom_call.1} parent=1 // pred_region
      %s117 = ssub.s32 16, 16
      %118 = vsyncadd [#allocation5], %s117
      %s120 = sshll.u32 [#allocation8], 4
      %s121 = int_to_ptr.vmem [resolvable:$true] %s120
      %123 = dma.vmem_to_hbm [thread:$0]  %s121, 16, %s2, [#allocation5]
    $region29: #{tpu_custom_call.1} parent=1 // pred_fallthru
      _
    // Predicated region
    $region30: #{tpu_custom_call.1} parent=1 // pred_check
      _
    $region31: #{tpu_custom_call.1} parent=1 // pred_check_branch
      %125 = sbr.rel (0) target = $region33
    $region32: #{tpu_custom_call.1} parent=1 // pred_region
      %126 = dma.done [#allocation5], 16
    $region33: #{tpu_custom_call.1} parent=1 // pred_fallthru
      _
    %127 = vsyncpa [#allocation4], 1
    %128 = vsyncpa [#allocation7], 1
    %129 = vsyncpa [#allocation5], 1

</llo_original>
